<compile_context>
chip_gen: v5e
topology: v5e:2x2
jax: 0.10.0
libtpu: 0.0.40
codegen_flags: <defaults>
</compile_context>

<pallas_src>
import functools

import jax
import jax.numpy as jnp
import numpy as np
from jax.experimental import pallas as pl
from jax.experimental.pallas import tpu as pltpu


def _mms_loss_kernel(s_ref, out_ref, colmax_ref, colsum_ref, rowlse_ref,
                     diag_ref, *, margin: float, inv_n: float):
    i = pl.program_id(0)
    tm, n = s_ref.shape

    @pl.when(i == 0)
    def _init():
        colmax_ref[...] = jnp.full((1, n), -jnp.inf, dtype=jnp.float32)
        colsum_ref[...] = jnp.zeros((1, n), dtype=jnp.float32)
        rowlse_ref[...] = jnp.zeros((1, 1), dtype=jnp.float32)
        diag_ref[...] = jnp.zeros((1, 1), dtype=jnp.float32)

    s = s_ref[...].astype(jnp.float32)

    # ---- Diagonal / margin: one lane iota + broadcast compare vs. per-row column id. ----
    # TODO(synk): restrict the masking to the (tm, tm) block at lane offset i*tm (dynamic
    # lane-offset slice/update) once that lowering is validated on all target generations.
    diag_col = jax.lax.broadcasted_iota(jnp.int32, (tm, 1), 0) + i * tm     # (tm, 1)
    col_ids = jax.lax.broadcasted_iota(jnp.int32, (tm, n), 1)               # (tm, n)
    is_diag = col_ids == diag_col
    s = jnp.where(is_diag, s - jnp.float32(margin), s)
    diag_ref[...] += jnp.sum(jnp.where(is_diag, s, jnp.float32(0.0)))

    # ---- Row path (I2C): per-row logsumexp of this tile (single full-tile exp). ----
    row_max = jnp.max(s, axis=1, keepdims=True)            # (tm, 1)  XLU lane reduce
    p_row = jnp.exp(s - row_max)                            # (tm, n)  EUP (only full exp)
    row_sum = jnp.sum(p_row, axis=1, keepdims=True)         # (tm, 1)  XLU lane reduce
    rowlse_ref[...] += jnp.sum(jnp.log(row_sum) + row_max)

    # ---- Column path (C2I): online logsumexp across row tiles, reusing p_row. ----
    tile_col_max = jnp.max(s, axis=0, keepdims=True)        # (1, n) sublane reduce
    new_max = jnp.maximum(colmax_ref[...], tile_col_max)    # (1, n)
    m0 = jnp.max(row_max, axis=0, keepdims=True)            # (1, 1) tile grand max
    # exp(s - new_max) == p_row * exp(row_max - m0) * exp(m0 - new_max).
    # exp(row_max - m0) <= 1; exp(m0 - new_max) is clamped for pathological spreads (>80).
    a = p_row * jnp.exp(row_max - m0)                       # (tm, n): one VPU mul / elem
    col_part = jnp.sum(a, axis=0, keepdims=True)            # (1, n) sublane reduce
    b = jnp.exp(jnp.minimum(m0 - new_max, jnp.float32(80.0)))        # (1, n)
    colsum_ref[...] = (colsum_ref[...] * jnp.exp(colmax_ref[...] - new_max)
                       + col_part * b)
    colmax_ref[...] = new_max

    @pl.when(i == pl.num_programs(0) - 1)
    def _finalize():
        col_lse_sum = jnp.sum(jnp.log(colsum_ref[...]) + colmax_ref[...])
        i2c = (rowlse_ref[...] - diag_ref[...]) * jnp.float32(inv_n)
        c2i = (col_lse_sum - diag_ref[...]) * jnp.float32(inv_n)
        out_ref[...] = (i2c + c2i).astype(out_ref.dtype)


def _pick_block_rows(n: int) -> int:
    """Largest row tile dividing N that keeps one f32 tile around <= 3 MiB (safe for v7x's
    64 MiB VMEM, decent amortization on v5e/v6e) and is a multiple of 32/16/8 so bf16
    inputs don't force sublane relayouts."""
    budget_rows = max(8, (3 * 1024 * 1024) // (4 * max(n, 1)))
    cap = min(n, 1024, budget_rows)
    for step in (32, 16, 8):
        best = 0
        tm = step
        while tm <= cap:
            if n % tm == 0:
                best = tm
            tm += step
        if best > 0:
            return best
    return n  # fall back to a single full-array block


def mms_loss(S: jax.Array, margin: float = 0.001, *, block_rows=None) -> jax.Array:
    """Pallas-TPU implementation of MMS_Loss.forward. S must be square (N, N)."""
    N = S.shape[0]
    assert S.ndim == 2 and S.shape == (N, N), "MMS loss expects a square similarity matrix"

    tm = _pick_block_rows(N) if block_rows is None else int(block_rows)
    assert N % tm == 0 and (tm % 8 == 0 or tm == N), (
        f"block_rows={tm} must divide N={N} and be a multiple of 8 (or equal N)")
    grid = (N // tm,)

    # Size the scoped-VMEM request from the footprint: double-buffered input tile,
    # ~7 tile-sized f32/i32 temporaries, (1,N) accumulators, plus headroom; keep it well
    # under v7x's 64 MiB physical VMEM (generous for v5e/v6e's 128 MiB).
    in_tile = tm * N * S.dtype.itemsize
    f32_tile = tm * N * 4
    needed = 2 * in_tile + 7 * f32_tile + 4 * (N * 4) + (1 << 20)
    vmem_limit = int(min(max(needed, 16 * 1024 * 1024), 40 * 1024 * 1024))

    kernel = functools.partial(_mms_loss_kernel, margin=float(margin),
                               inv_n=1.0 / float(N))
    out = pl.pallas_call(
        kernel,
        out_shape=jax.ShapeDtypeStruct((1, 1), jnp.float32),
        grid_spec=pltpu.PrefetchScalarGridSpec(
            num_scalar_prefetch=0,
            grid=grid,
            in_specs=[pl.BlockSpec((tm, N), lambda i: (i, 0))],
            out_specs=pl.BlockSpec((1, 1), lambda i: (0, 0)),
            scratch_shapes=[
                pltpu.VMEM((1, N), jnp.float32),   # running column max
                pltpu.VMEM((1, N), jnp.float32),   # running column sum-exp
                pltpu.VMEM((1, 1), jnp.float32),   # accumulated sum_i row_lse
                pltpu.VMEM((1, 1), jnp.float32),   # accumulated diagonal sum
            ],
        ),
        compiler_params=pltpu.CompilerParams(
            # TODO(synk): on v7x, split the row range over both TensorCores (leading
            # parallel axis + per-half partials and a tiny epilogue) instead of one
            # "arbitrary" axis; single-TC here keeps the carried accumulators simple.
            dimension_semantics=("arbitrary",),
            vmem_limit_bytes=vmem_limit,
        ),
    )(S)
    return out[0, 0]


def _mms_loss_ref(S: jax.Array, margin: float = 0.001) -> jax.Array:
    """Plain-JAX reference matching the PyTorch module."""
    N = S.shape[0]
    Sf = S.astype(jnp.float32) - margin * jnp.eye(N, dtype=jnp.float32)
    tgt = jnp.arange(N)
    i2c = -jnp.mean(jax.nn.log_softmax(Sf, axis=1)[tgt, tgt])
    c2i = -jnp.mean(jax.nn.log_softmax(Sf.T, axis=1)[tgt, tgt])
    return i2c + c2i


if __name__ == "__main__":
    # Small similarity matrix: 256 items vs. 256 captions.
    N = 256
    key = jax.random.PRNGKey(0)
    S = jax.random.normal(key, (N, N), dtype=jnp.float32)

    ref = jax.block_until_ready(_mms_loss_ref(S, margin=0.001))

    # Tiled path (grid of 4 row tiles) -> exercises the online column logsumexp.
    loss_tiled = jax.block_until_ready(mms_loss(S, margin=0.001, block_rows=64))
    np.testing.assert_allclose(np.asarray(loss_tiled), np.asarray(ref),
                               rtol=5e-4, atol=5e-4)

    # Auto tile picker (single full block at this small size).
    loss_auto = jax.block_until_ready(mms_loss(S, margin=0.001))
    np.testing.assert_allclose(np.asarray(loss_auto), np.asarray(ref),
                               rtol=5e-4, atol=5e-4)

    # bf16 input path (halves HBM traffic); compare against the reference computed on the
    # same bf16-rounded matrix so only in-kernel f32 math differs.
    S_bf16 = S.astype(jnp.bfloat16)
    ref_bf16 = jax.block_until_ready(_mms_loss_ref(S_bf16.astype(jnp.float32), margin=0.001))
    loss_bf16 = jax.block_until_ready(mms_loss(S_bf16, margin=0.001, block_rows=64))
    np.testing.assert_allclose(np.asarray(loss_bf16), np.asarray(ref_bf16),
                               rtol=1e-3, atol=1e-3)

    print("KERNEL_OK")
</pallas_src>

<mosaic_0001>
module attributes {stable_mosaic.version = 11 : i64} {
  func.func @_mms_loss_kernel(%arg0: i32, %arg1: memref<64x256xf32, #tpu.memory_space<vmem>>, %arg2: memref<1x1xf32, #tpu.memory_space<vmem>>, %arg3: memref<1x256xf32, #tpu.memory_space<vmem>>, %arg4: memref<1x256xf32, #tpu.memory_space<vmem>>, %arg5: memref<1x1xf32, #tpu.memory_space<vmem>>, %arg6: memref<1x1xf32, #tpu.memory_space<vmem>>) attributes {dimension_semantics = [#tpu.dimension_semantics<arbitrary>], iteration_bounds = array<i64: 4>, scalar_prefetch = 0 : i64, scratch_operands = 4 : i64, tpu.core_type = #tpu.core_type<tc>, window_params = [{transform_indices = @transform_0, window_bounds = array<i64: 64, 256>}, {pipeline_mode = #tpu.pipeline_mode<synchronous>, transform_indices = @transform_1, window_bounds = array<i64: 1, 1>}]} {
    %c0_i32 = arith.constant 0 : i32
    %0 = arith.cmpi eq, %arg0, %c0_i32 : i32
    %1 = arith.extui %0 : i1 to i32
    %c0_i32_0 = arith.constant 0 : i32
    %2 = arith.cmpi ne, %1, %c0_i32_0 : i32
    scf.if %2 {
      %cst_30 = arith.constant 0xFF800000 : f32
      %71 = vector.broadcast %cst_30 : f32 to vector<1x256xf32>
      %c0_31 = arith.constant 0 : index
      %c0_32 = arith.constant 0 : index
      %72 = vector.load %arg3[%c0_31, %c0_32] : memref<1x256xf32, #tpu.memory_space<vmem>>, vector<1x256xf32>
      tpu.vector_store %arg3[%c0_31, %c0_32], %71 {strides = array<i32>} : memref<1x256xf32, #tpu.memory_space<vmem>>, vector<1x256xf32>,
      %cst_33 = arith.constant 0.000000e+00 : f32
      %73 = vector.broadcast %cst_33 : f32 to vector<1x256xf32>
      %c0_34 = arith.constant 0 : index
      %c0_35 = arith.constant 0 : index
      %74 = vector.load %arg4[%c0_34, %c0_35] : memref<1x256xf32, #tpu.memory_space<vmem>>, vector<1x256xf32>
      tpu.vector_store %arg4[%c0_34, %c0_35], %73 {strides = array<i32>} : memref<1x256xf32, #tpu.memory_space<vmem>>, vector<1x256xf32>,
      %cst_36 = arith.constant 0.000000e+00 : f32
      %75 = vector.broadcast %cst_36 : f32 to vector<1x1xf32>
      %c0_37 = arith.constant 0 : index
      %c0_38 = arith.constant 0 : index
      %76 = vector.load %arg5[%c0_37, %c0_38] : memref<1x1xf32, #tpu.memory_space<vmem>>, vector<1x1xf32>
      tpu.vector_store %arg5[%c0_37, %c0_38], %75 {strides = array<i32>} : memref<1x1xf32, #tpu.memory_space<vmem>>, vector<1x1xf32>,
      %cst_39 = arith.constant 0.000000e+00 : f32
      %77 = vector.broadcast %cst_39 : f32 to vector<1x1xf32>
      %c0_40 = arith.constant 0 : index
      %c0_41 = arith.constant 0 : index
      %78 = vector.load %arg6[%c0_40, %c0_41] : memref<1x1xf32, #tpu.memory_space<vmem>>, vector<1x1xf32>
      tpu.vector_store %arg6[%c0_40, %c0_41], %77 {strides = array<i32>} : memref<1x1xf32, #tpu.memory_space<vmem>>, vector<1x1xf32>,
    } else {
    }
    %c0 = arith.constant 0 : index
    %c0_1 = arith.constant 0 : index
    %3 = vector.load %arg1[%c0, %c0_1] : memref<64x256xf32, #tpu.memory_space<vmem>>, vector<64x256xf32>
    %4 = tpu.iota {dimensions = array<i32: 0>} : vector<64x1xi32>
    %c64_i32 = arith.constant 64 : i32
    %5 = arith.muli %arg0, %c64_i32 : i32
    %6 = vector.broadcast %5 : i32 to vector<64x1xi32>
    %7 = arith.addi %4, %6 : vector<64x1xi32>
    %8 = tpu.iota {dimensions = array<i32: 1>} : vector<64x256xi32>
    %9 = vector.broadcast %7 : vector<64x1xi32> to vector<64x256xi32>
    %10 = arith.cmpi eq, %8, %9 : vector<64x256xi32>
    %cst = arith.constant 1.000000e-03 : f32
    %11 = vector.broadcast %cst : f32 to vector<64x256xf32>
    %12 = arith.subf %3, %11 : vector<64x256xf32>
    %13 = arith.select %10, %12, %3 : vector<64x256xi1>, vector<64x256xf32>
    %c0_2 = arith.constant 0 : index
    %c0_3 = arith.constant 0 : index
    %14 = vector.load %arg6[%c0_2, %c0_3] : memref<1x1xf32, #tpu.memory_space<vmem>>, vector<1x1xf32>
    %cst_4 = arith.constant 0.000000e+00 : f32
    %15 = vector.broadcast %cst_4 : f32 to vector<64x256xf32>
    %16 = arith.select %10, %13, %15 : vector<64x256xi1>, vector<64x256xf32>
    %17 = vector.shape_cast %16 : vector<64x256xf32> to vector<1x64x256xf32>
    %cst_5 = arith.constant dense<0.000000e+00> : vector<1xf32>
    %18 = vector.multi_reduction <add>, %17, %cst_5 [1, 2] : vector<1x64x256xf32> to vector<1xf32>
    %19 = vector.shape_cast %18 : vector<1xf32> to vector<1x1x1xf32>
    %20 = vector.extract %19[0, 0, 0] : f32 from vector<1x1x1xf32>
    %21 = vector.broadcast %20 : f32 to vector<1x1xf32>
    %22 = arith.addf %14, %21 : vector<1x1xf32>
    %c0_6 = arith.constant 0 : index
    %c0_7 = arith.constant 0 : index
    %23 = vector.load %arg6[%c0_6, %c0_7] : memref<1x1xf32, #tpu.memory_space<vmem>>, vector<1x1xf32>
    tpu.vector_store %arg6[%c0_6, %c0_7], %22 {strides = array<i32>} : memref<1x1xf32, #tpu.memory_space<vmem>>, vector<1x1xf32>,
    %cst_8 = arith.constant dense<0xFF800000> : vector<64xf32>
    %24 = vector.multi_reduction <maximumf>, %13, %cst_8 [1] : vector<64x256xf32> to vector<64xf32>
    %25 = vector.shape_cast %24 : vector<64xf32> to vector<64x1xf32>
    %26 = vector.broadcast %25 : vector<64x1xf32> to vector<64x256xf32>
    %27 = arith.subf %13, %26 : vector<64x256xf32>
    %28 = math.exp %27 : vector<64x256xf32>
    %cst_9 = arith.constant dense<0.000000e+00> : vector<64xf32>
    %29 = vector.multi_reduction <add>, %28, %cst_9 [1] : vector<64x256xf32> to vector<64xf32>
    %30 = vector.shape_cast %29 : vector<64xf32> to vector<64x1xf32>
    %c0_10 = arith.constant 0 : index
    %c0_11 = arith.constant 0 : index
    %31 = vector.load %arg5[%c0_10, %c0_11] : memref<1x1xf32, #tpu.memory_space<vmem>>, vector<1x1xf32>
    %32 = math.log %30 : vector<64x1xf32>
    %33 = arith.addf %32, %25 : vector<64x1xf32>
    %34 = vector.shape_cast %33 : vector<64x1xf32> to vector<1x64x1xf32>
    %cst_12 = arith.constant dense<0.000000e+00> : vector<1xf32>
    %35 = vector.multi_reduction <add>, %34, %cst_12 [1, 2] : vector<1x64x1xf32> to vector<1xf32>
    %36 = vector.shape_cast %35 : vector<1xf32> to vector<1x1x1xf32>
    %37 = vector.extract %36[0, 0, 0] : f32 from vector<1x1x1xf32>
    %38 = vector.broadcast %37 : f32 to vector<1x1xf32>
    %39 = arith.addf %31, %38 : vector<1x1xf32>
    %c0_13 = arith.constant 0 : index
    %c0_14 = arith.constant 0 : index
    %40 = vector.load %arg5[%c0_13, %c0_14] : memref<1x1xf32, #tpu.memory_space<vmem>>, vector<1x1xf32>
    tpu.vector_store %arg5[%c0_13, %c0_14], %39 {strides = array<i32>} : memref<1x1xf32, #tpu.memory_space<vmem>>, vector<1x1xf32>,
    %cst_15 = arith.constant dense<0xFF800000> : vector<256xf32>
    %41 = vector.multi_reduction <maximumf>, %13, %cst_15 [0] : vector<64x256xf32> to vector<256xf32>
    %42 = vector.shape_cast %41 : vector<256xf32> to vector<1x256xf32>
    %c0_16 = arith.constant 0 : index
    %c0_17 = arith.constant 0 : index
    %43 = vector.load %arg3[%c0_16, %c0_17] : memref<1x256xf32, #tpu.memory_space<vmem>>, vector<1x256xf32>
    %44 = arith.maximumf %43, %42 : vector<1x256xf32>
    %cst_18 = arith.constant dense<0xFF800000> : vector<1xf32>
    %45 = vector.multi_reduction <maximumf>, %25, %cst_18 [0] : vector<64x1xf32> to vector<1xf32>
    %46 = vector.shape_cast %45 : vector<1xf32> to vector<1x1xf32>
    %47 = vector.broadcast %46 : vector<1x1xf32> to vector<64x1xf32>
    %48 = arith.subf %25, %47 : vector<64x1xf32>
    %49 = math.exp %48 : vector<64x1xf32>
    %50 = vector.broadcast %49 : vector<64x1xf32> to vector<64x256xf32>
    %51 = arith.mulf %28, %50 : vector<64x256xf32>
    %cst_19 = arith.constant dense<0.000000e+00> : vector<256xf32>
    %52 = vector.multi_reduction <add>, %51, %cst_19 [0] : vector<64x256xf32> to vector<256xf32>
    %53 = vector.shape_cast %52 : vector<256xf32> to vector<1x256xf32>
    %54 = vector.broadcast %46 : vector<1x1xf32> to vector<1x256xf32>
    %55 = arith.subf %54, %44 : vector<1x256xf32>
    %cst_20 = arith.constant 8.000000e+01 : f32
    %56 = vector.broadcast %cst_20 : f32 to vector<1x256xf32>
    %57 = arith.minimumf %55, %56 : vector<1x256xf32>
    %58 = math.exp %57 : vector<1x256xf32>
    %c0_21 = arith.constant 0 : index
    %c0_22 = arith.constant 0 : index
    %59 = vector.load %arg4[%c0_21, %c0_22] : memref<1x256xf32, #tpu.memory_space<vmem>>, vector<1x256xf32>
    %c0_23 = arith.constant 0 : index
    %c0_24 = arith.constant 0 : index
    %60 = vector.load %arg3[%c0_23, %c0_24] : memref<1x256xf32, #tpu.memory_space<vmem>>, vector<1x256xf32>
    %61 = arith.subf %60, %44 : vector<1x256xf32>
    %62 = math.exp %61 : vector<1x256xf32>
    %63 = arith.mulf %59, %62 : vector<1x256xf32>
    %64 = arith.mulf %53, %58 : vector<1x256xf32>
    %65 = arith.addf %63, %64 : vector<1x256xf32>
    %c0_25 = arith.constant 0 : index
    %c0_26 = arith.constant 0 : index
    %66 = vector.load %arg4[%c0_25, %c0_26] : memref<1x256xf32, #tpu.memory_space<vmem>>, vector<1x256xf32>
    tpu.vector_store %arg4[%c0_25, %c0_26], %65 {strides = array<i32>} : memref<1x256xf32, #tpu.memory_space<vmem>>, vector<1x256xf32>,
    %c0_27 = arith.constant 0 : index
    %c0_28 = arith.constant 0 : index
    %67 = vector.load %arg3[%c0_27, %c0_28] : memref<1x256xf32, #tpu.memory_space<vmem>>, vector<1x256xf32>
    tpu.vector_store %arg3[%c0_27, %c0_28], %44 {strides = array<i32>} : memref<1x256xf32, #tpu.memory_space<vmem>>, vector<1x256xf32>,
    %c3_i32 = arith.constant 3 : i32
    %68 = arith.cmpi eq, %arg0, %c3_i32 : i32
    %69 = arith.extui %68 : i1 to i32
    %c0_i32_29 = arith.constant 0 : i32
    %70 = arith.cmpi ne, %69, %c0_i32_29 : i32
    scf.if %70 {
      %c0_30 = arith.constant 0 : index
      %c0_31 = arith.constant 0 : index
      %71 = vector.load %arg4[%c0_30, %c0_31] : memref<1x256xf32, #tpu.memory_space<vmem>>, vector<1x256xf32>
      %72 = math.log %71 : vector<1x256xf32>
      %c0_32 = arith.constant 0 : index
      %c0_33 = arith.constant 0 : index
      %73 = vector.load %arg3[%c0_32, %c0_33] : memref<1x256xf32, #tpu.memory_space<vmem>>, vector<1x256xf32>
      %74 = arith.addf %72, %73 : vector<1x256xf32>
      %75 = vector.shape_cast %74 : vector<1x256xf32> to vector<1x1x256xf32>
      %cst_34 = arith.constant dense<0.000000e+00> : vector<1xf32>
      %76 = vector.multi_reduction <add>, %75, %cst_34 [1, 2] : vector<1x1x256xf32> to vector<1xf32>
      %77 = vector.shape_cast %76 : vector<1xf32> to vector<1x1x1xf32>
      %78 = vector.extract %77[0, 0, 0] : f32 from vector<1x1x1xf32>
      %c0_35 = arith.constant 0 : index
      %c0_36 = arith.constant 0 : index
      %79 = vector.load %arg5[%c0_35, %c0_36] : memref<1x1xf32, #tpu.memory_space<vmem>>, vector<1x1xf32>
      %c0_37 = arith.constant 0 : index
      %c0_38 = arith.constant 0 : index
      %80 = vector.load %arg6[%c0_37, %c0_38] : memref<1x1xf32, #tpu.memory_space<vmem>>, vector<1x1xf32>
      %81 = arith.subf %79, %80 : vector<1x1xf32>
      %cst_39 = arith.constant 3.906250e-03 : f32
      %82 = vector.broadcast %cst_39 : f32 to vector<1x1xf32>
      %83 = arith.mulf %81, %82 : vector<1x1xf32>
      %c0_40 = arith.constant 0 : index
      %c0_41 = arith.constant 0 : index
      %84 = vector.load %arg6[%c0_40, %c0_41] : memref<1x1xf32, #tpu.memory_space<vmem>>, vector<1x1xf32>
      %85 = vector.broadcast %78 : f32 to vector<1x1xf32>
      %86 = arith.subf %85, %84 : vector<1x1xf32>
      %cst_42 = arith.constant 3.906250e-03 : f32
      %87 = vector.broadcast %cst_42 : f32 to vector<1x1xf32>
      %88 = arith.mulf %86, %87 : vector<1x1xf32>
      %89 = arith.addf %83, %88 : vector<1x1xf32>
      %c0_43 = arith.constant 0 : index
      %c0_44 = arith.constant 0 : index
      %90 = vector.load %arg2[%c0_43, %c0_44] : memref<1x1xf32, #tpu.memory_space<vmem>>, vector<1x1xf32>
      tpu.vector_store %arg2[%c0_43, %c0_44], %89 {strides = array<i32>} : memref<1x1xf32, #tpu.memory_space<vmem>>, vector<1x1xf32>,
    } else {
    }
    return
  }
  func.func @transform_0(%arg0: i32) -> (i32, i32) {
    %c0_i32 = arith.constant 0 : i32
    %c0_i32_0 = arith.constant 0 : i32
    return %arg0, %c0_i32 : i32, i32
  }
  func.func @transform_1(%arg0: i32) -> (i32, i32) {
    %c0_i32 = arith.constant 0 : i32
    %c0_i32_0 = arith.constant 0 : i32
    %c0_i32_1 = arith.constant 0 : i32
    return %c0_i32, %c0_i32_0 : i32, i32
  }
}

</mosaic_0001>

<llo_original>
// kernel: tpu_custom_call.1
$region0: #{tpu_custom_call.1}
  #allocation0 [shape = 'u32[]', space=smem, size = 0x4, offset = 0x4, fixed_abs, tag = 'smem constant byte address 0x4 - core index']
  #allocation1 [shape = 'u32[72,128]{1,0:T(1,128)}', space=vmem, size = 0x9000, scoped, tag = 'internal scratch']
  #allocation2 [shape = 'f32[1,256]{1,0:T(1,128)}', space=vmem, size = 0x400, scoped, tag = 'scratch operand']
  #allocation3 [shape = 'f32[1,256]{1,0:T(1,128)}', space=vmem, size = 0x400, scoped, tag = 'scratch operand']
  #allocation4 [shape = 'f32[1,1]{1,0:T(1,128)}', space=vmem, size = 0x200, scoped, tag = 'scratch operand']
  #allocation5 [shape = 'f32[1,1]{1,0:T(1,128)}', space=vmem, size = 0x200, scoped, tag = 'scratch operand']
  %s0 = inlined_call_operand.hbm [shape: f32[256,256], index: 0, kind: input, shape index: {}]
  %s1 = inlined_call_operand.hbm [shape: f32[1,1], index: 1, kind: output, shape index: {}]
  %s2 = sld [smem:[#allocation0]]
  $region49: #{tpu_custom_call.1} parent=0
    _
  %s4 = ssub.s32 1, %s2
  %s5 = scalar_select 0, %s4, %s2
  $region1: #{tpu_custom_call.1} parent=0
    #allocation6 [shape = 'u8[131072]{0}', space=vmem, size = 0x20000, scoped, tag = 'input window, operand 0']
    #allocation7 [shape = 's32[2]{0}', space=sflag, size = 0x8, scoped, tag = 'scoped memory for tpu_custom_call.1']
    #allocation8 [shape = 's32[2]{0}', space=sflag, size = 0x8, scoped, tag = 'scoped memory for tpu_custom_call.1']
    #allocation9 [shape = 'u8[512]{0}', space=vmem, size = 0x400, scoped, tag = 'output window, operand 0, single buffered']
    %6 = vsyncpa [#allocation7], 0
    %s7 = scalar_lea.sflag [#allocation7], 1
    %8 = vsyncpa %s7, 0
    %9 = vsyncpa [#allocation8], 0
    loop: start=0, step=1, limit=6
    $region2: #{tpu_custom_call.1} parent=1 // loop_pre_header
      _
    $region3: #{tpu_custom_call.1} parent=1 // loop_header
      %s11 = sphi 0, %s15
      %p12 = scmp.ge.s32.totalorder %s11, 6
      %s21 = sphi 0, %s23
      %s24 = sphi 0, %s21
      %s25 = sphi 0, %s24
      %s41 = sphi 0, %s25
      %s45 = sphi 0, %s45
      %s47 = sphi 0, %s45
      %s48 = sphi 0, %s47
      %s62 = sphi 0, %s48
    $region4: #{tpu_custom_call.1} parent=1 // loop_header_branch
      %14 = sbr.rel (%p12) target = $region8
    $region5: #{tpu_custom_call.1} parent=1 // loop_body
      %s16 = ssub.s32 %s11, 1
      %s17 = ssub.s32 %s11, 2
      %s18 = sadd.s32 %s11, 1
      %s19 = ssub.s32 %s11, %s18
      %p20 = scmp.eq.s32.totalorder %s19, 0
      %s22 = sadd.s32 %s21, 1
      %s23 = scalar_select %p20, %s21, %s22
      %p26 = pneg %p20
      %p27 = scmp.eq.s32.totalorder %s11, 3
      %p28 = por %p26, %p27
      %p29 = scmp.ne.s32.totalorder %s21, %s24
      %p30 = scmp.eq.s32.totalorder %s11, 0
      %p31 = por %p29, %p30
      %p32 = scmp.ne.s32.totalorder %s21, %s24
      %p33 = scmp.eq.s32.totalorder %s16, 3
      %p34 = por %p32, %p33
      %p35 = scmp.ne.s32.totalorder %s24, %s25
      %p36 = scmp.eq.s32.totalorder %s16, 0
      %p37 = por %p35, %p36
      %p38 = scmp.ne.s32.totalorder %s24, %s25
      %p39 = scmp.eq.s32.totalorder %s17, 3
      %p40 = por %p38, %p39
      %p42 = scmp.ne.s32.totalorder %s25, %s41
      %p43 = scmp.eq.s32.totalorder %s17, 0
      %p44 = por %p42, %p43
      %s46 = sadd.s32 %s45, 1
      %p49 = scmp.eq.s32.totalorder %s11, 3
      %p50 = scmp.ne.s32.totalorder %s45, %s47
      %p51 = scmp.eq.s32.totalorder %s11, 0
      %p52 = por %p50, %p51
      %p53 = scmp.ne.s32.totalorder %s45, %s47
      %p54 = scmp.eq.s32.totalorder %s16, 3
      %p55 = por %p53, %p54
      %p56 = scmp.ne.s32.totalorder %s47, %s48
      %p57 = scmp.eq.s32.totalorder %s16, 0
      %p58 = por %p56, %p57
      %p59 = scmp.ne.s32.totalorder %s47, %s48
      %p60 = scmp.eq.s32.totalorder %s17, 3
      %p61 = por %p59, %p60
      %p63 = scmp.ne.s32.totalorder %s48, %s62
      %p64 = scmp.eq.s32.totalorder %s17, 0
      %p65 = por %p63, %p64
      %p66 = scmp.le.s32.totalorder 1, %s11
      %p67 = scmp.lt.s32.totalorder %s11, 5
      %p68 = pnand %p66, %p67
      %p69 = pneg %p68
      // Predicated region
      $region9: #{tpu_custom_call.1} parent=5 // pred_check
        _
      $region10: #{tpu_custom_call.1} parent=5 // pred_check_branch
        %71 = sbr.rel (%p68) target = $region12
      $region11: #{tpu_custom_call.1} parent=5 // pred_region
        %s72 = ssub.s32 %s11, 1
      $region12: #{tpu_custom_call.1} parent=5 // pred_fallthru
        _
      %p73 = scmp.lt.s32.totalorder %s11, 4
      // Predicated region
      $region13: #{tpu_custom_call.1} parent=5 // pred_check
        %p74 = pneg %p73
      $region14: #{tpu_custom_call.1} parent=5 // pred_check_branch
        %76 = sbr.rel (%p74) target = $region16
      $region15: #{tpu_custom_call.1} parent=5 // pred_region
        // Predicated region
        $region17: #{tpu_custom_call.1} parent=15 // pred_check
          %p77 = pneg %p31
        $region18: #{tpu_custom_call.1} parent=15 // pred_check_branch
          %79 = sbr.rel (%p77) target = $region20
        $region19: #{tpu_custom_call.1} parent=15 // pred_region
          %s80 = sand.u32 %s21, 1
          %s81 = scalar_lea.sflag [#allocation7], %s80
          %s82 = sand.u32 %s21, 1
          %s83 = smul.addr %s82, 128
          %s84 = scalar_lea.vmem [#allocation6], %s83
          %s85 = smul.u32 8, %s11
          %87 = vsyncadd %s81, 0
          %s88 = smul.addr %s85, 2
          %s89 = smul.addr %s88, 8
          %s90 = scalar_lea.hbm %s0, %s89
          %s91 = sshll.u32 %s90, 4
          %s92 = int_to_ptr.hbm [resolvable:$true] %s91
          %s93 = sshll.u32 %s84, 4
          %s94 = int_to_ptr.vmem [resolvable:$true] %s93
          %99 = dma.hbm_to_vmem [thread:$0]  %s92, 2048, %s94, %s81, 256, 256, 16
        $region20: #{tpu_custom_call.1} parent=15 // pred_fallthru
          _
      $region16: #{tpu_custom_call.1} parent=5 // pred_fallthru
        _
      %p100 = scmp.le.s32.totalorder 1, %s11
      %p101 = scmp.lt.s32.totalorder %s11, 5
      %p102 = pnand %p100, %p101
      %p103 = pneg %p102
      // Predicated region
      $region21: #{tpu_custom_call.1} parent=5 // pred_check
        _
      $region22: #{tpu_custom_call.1} parent=5 // pred_check_branch
        %105 = sbr.rel (%p102) target = $region24
      $region23: #{tpu_custom_call.1} parent=5 // pred_region
        %s106 = ssub.s32 %s11, 1
        %s107 = sand.u32 %s24, 1
        %s108 = scalar_lea.sflag [#allocation7], %s107
        %s109 = sand.u32 %s24, 1
        %s110 = smul.addr %s109, 128
        %s111 = scalar_lea.vmem [#allocation6], %s110
        // Predicated region
        $region25: #{tpu_custom_call.1} parent=23 // pred_check
          %p112 = pneg %p37
        $region26: #{tpu_custom_call.1} parent=23 // pred_check_branch
          %114 = sbr.rel (%p112) target = $region28
        $region27: #{tpu_custom_call.1} parent=23 // pred_region
          %116 = dma.done %s108, 2048
        $region28: #{tpu_custom_call.1} parent=23 // pred_fallthru
          _
        %s117 = sand.u32 %s24, 1
        %s118 = scalar_lea.sflag [#allocation7], %s117
        %s119 = sand.u32 %s24, 1
        %s120 = smul.addr %s119, 128
        %s121 = scalar_lea.vmem [#allocation6], %s120
        %p122 = pneg %p37
        %p123 = pneg %p34
        %p124 = pneg %p58
        %p125 = pneg %p55
        %s126 = smul.u32 8, %s16
        %p127 = scmp.eq.s32.totalorder %s16, 0
        // Predicated region
        $region29: #{tpu_custom_call.1} parent=23 // pred_check
          %p128 = pneg %p127
        $region30: #{tpu_custom_call.1} parent=23 // pred_check_branch
          %130 = sbr.rel (%p128) target = $region32
        $region31: #{tpu_custom_call.1} parent=23 // pred_region
          %v131 = vlaneseq
          %vm132 = vcmp.ge.s32.totalorder %v131, 0
          %vm133 = vcmp.lt.s32.totalorder %v131, 256
          %vm134 = vmand %vm132, %vm133
          %135 = vst.msk [vmem:[#allocation2] sm:$0x3] %vm134, -inf
          %136 = vst.msk [vmem:[#allocation3] sm:$0x3] %vm134, 0.0
          %vm137 = vcmask 0
          %138 = vst.msk [vmem:[#allocation4] sm:$0x1] %vm137, 0.0
          %139 = vst.msk [vmem:[#allocation5] sm:$0x1] %vm137, 0.0
        $region32: #{tpu_custom_call.1} parent=23 // pred_fallthru
          _
        %v140 = vld [vmem:[%s111] sm:$0xff]
        %v141 = vld [vmem:[%s111 + $0x8] sm:$0xff]
        %v142 = vld [vmem:[%s111 + $0x10] sm:$0xff]
        %v143 = vld [vmem:[%s111 + $0x18] sm:$0xff]
        %v144 = vld [vmem:[%s111 + $0x20] sm:$0xff]
        %v145 = vld [vmem:[%s111 + $0x28] sm:$0xff]
        %v146 = vld [vmem:[%s111 + $0x30] sm:$0xff]
        %v147 = vld [vmem:[%s111 + $0x38] sm:$0xff]
        %v148 = vld [vmem:[%s111 + $0x40] sm:$0xff]
        %v149 = vld [vmem:[%s111 + $0x48] sm:$0xff]
        %v150 = vld [vmem:[%s111 + $0x50] sm:$0xff]
        %v151 = vld [vmem:[%s111 + $0x58] sm:$0xff]
        %v152 = vld [vmem:[%s111 + $0x60] sm:$0xff]
        %v153 = vld [vmem:[%s111 + $0x68] sm:$0xff]
        %v154 = vld [vmem:[%s111 + $0x70] sm:$0xff]
        %v155 = vld [vmem:[%s111 + $0x78] sm:$0xff]
        %v156 = vlaneseq
        %v157 = vshrl.u32 %v156, 7
        %v158 = vadd.s32 %v157, 8
        %v159 = vadd.s32 %v157, 16
        %v160 = vadd.s32 %v157, 24
        %v161 = vadd.s32 %v157, 32
        %v162 = vadd.s32 %v157, 40
        %v163 = vadd.s32 %v157, 48
        %v164 = vadd.s32 %v157, 56
        %s165 = smul.u32 %s16, 64
        %v166 = vstv %s165
        %v167 = vadd.s32 %v157, %v166
        %v168 = vadd.s32 %v158, %v166
        %v169 = vadd.s32 %v159, %v166
        %v170 = vadd.s32 %v160, %v166
        %v171 = vadd.s32 %v161, %v166
        %v172 = vadd.s32 %v162, %v166
        %v173 = vadd.s32 %v163, %v166
        %v174 = vadd.s32 %v164, %v166
        %v175 = vlaneseq
        %v176 = vand.u32 %v175, 127
        %v177 = vadd.s32 %v176, 128
        %vm178 = vcmp.eq.s32.totalorder %v176, %v167
        %vm179 = vcmp.eq.s32.totalorder %v177, %v167
        %vm180 = vcmp.eq.s32.totalorder %v176, %v168
        %vm181 = vcmp.eq.s32.totalorder %v177, %v168
        %vm182 = vcmp.eq.s32.totalorder %v176, %v169
        %vm183 = vcmp.eq.s32.totalorder %v177, %v169
        %vm184 = vcmp.eq.s32.totalorder %v176, %v170
        %vm185 = vcmp.eq.s32.totalorder %v177, %v170
        %vm186 = vcmp.eq.s32.totalorder %v176, %v171
        %vm187 = vcmp.eq.s32.totalorder %v177, %v171
        %vm188 = vcmp.eq.s32.totalorder %v176, %v172
        %vm189 = vcmp.eq.s32.totalorder %v177, %v172
        %vm190 = vcmp.eq.s32.totalorder %v176, %v173
        %vm191 = vcmp.eq.s32.totalorder %v177, %v173
        %vm192 = vcmp.eq.s32.totalorder %v176, %v174
        %vm193 = vcmp.eq.s32.totalorder %v177, %v174
        %v194 = vsub.f32 %v140, 0.001
        %v195 = vsub.f32 %v141, 0.001
        %v196 = vsub.f32 %v142, 0.001
        %v197 = vsub.f32 %v143, 0.001
        %v198 = vsub.f32 %v144, 0.001
        %v199 = vsub.f32 %v145, 0.001
        %v200 = vsub.f32 %v146, 0.001
        %v201 = vsub.f32 %v147, 0.001
        %v202 = vsub.f32 %v148, 0.001
        %v203 = vsub.f32 %v149, 0.001
        %v204 = vsub.f32 %v150, 0.001
        %v205 = vsub.f32 %v151, 0.001
        %v206 = vsub.f32 %v152, 0.001
        %v207 = vsub.f32 %v153, 0.001
        %v208 = vsub.f32 %v154, 0.001
        %v209 = vsub.f32 %v155, 0.001
        %v210 = vsel %vm178, %v194, %v140
        %v211 = vsel %vm179, %v195, %v141
        %v212 = vsel %vm180, %v196, %v142
        %v213 = vsel %vm181, %v197, %v143
        %v214 = vsel %vm182, %v198, %v144
        %v215 = vsel %vm183, %v199, %v145
        %v216 = vsel %vm184, %v200, %v146
        %v217 = vsel %vm185, %v201, %v147
        %v218 = vsel %vm186, %v202, %v148
        %v219 = vsel %vm187, %v203, %v149
        %v220 = vsel %vm188, %v204, %v150
        %v221 = vsel %vm189, %v205, %v151
        %v222 = vsel %vm190, %v206, %v152
        %v223 = vsel %vm191, %v207, %v153
        %v224 = vsel %vm192, %v208, %v154
        %v225 = vsel %vm193, %v209, %v155
        %v226 = vld [vmem:[#allocation5] sm:$0x1]
        %v227 = vsel %vm178, %v194, 0.0
        %v228 = vsel %vm179, %v195, 0.0
        %v229 = vsel %vm180, %v196, 0.0
        %v230 = vsel %vm181, %v197, 0.0
        %v231 = vsel %vm182, %v198, 0.0
        %v232 = vsel %vm183, %v199, 0.0
        %v233 = vsel %vm184, %v200, 0.0
        %v234 = vsel %vm185, %v201, 0.0
        %v235 = vsel %vm186, %v202, 0.0
        %v236 = vsel %vm187, %v203, 0.0
        %v237 = vsel %vm188, %v204, 0.0
        %v238 = vsel %vm189, %v205, 0.0
        %v239 = vsel %vm190, %v206, 0.0
        %v240 = vsel %vm191, %v207, 0.0
        %v241 = vsel %vm192, %v208, 0.0
        %v242 = vsel %vm193, %v209, 0.0
        %v243 = vadd.f32 %v227, %v228
        %v244 = vadd.f32 %v243, %v229
        %v245 = vadd.f32 %v244, %v230
        %v246 = vadd.f32 %v245, %v231
        %v247 = vadd.f32 %v246, %v232
        %v248 = vadd.f32 %v247, %v233
        %v249 = vadd.f32 %v248, %v234
        %v250 = vadd.f32 %v249, %v235
        %v251 = vadd.f32 %v250, %v236
        %v252 = vadd.f32 %v251, %v237
        %v253 = vadd.f32 %v252, %v238
        %v254 = vadd.f32 %v253, %v239
        %v255 = vadd.f32 %v254, %v240
        %v256 = vadd.f32 %v255, %v241
        %v257 = vadd.f32 %v256, %v242
        %258 = vadd.xlane.f32.xlu0 %v257
        %v259 = vpop.xlane.xlu0 %258
        %v260 = vrot.slane %v259, 4
        %v261 = vadd.f32 %v259, %v260
        %v262 = vrot.slane %v261, 2
        %v263 = vadd.f32 %v261, %v262
        %v264 = vrot.slane %v263, 1
        %v265 = vadd.f32 %v263, %v264
        %s266 = vtos %v265
        %v267 = vstv %s266
        %v268 = vadd.f32 %v226, %v267
        %vm269 = vcmask 0
        %270 = vst.msk [vmem:[#allocation5] sm:$0x1] %vm269, %v268
        %v271 = vmax.f32 %v210, %v211
        %272 = vmax.xlane.f32.xlu0 %v271
        %v273 = vpop.xlane.xlu0 %272
        %v274 = vmax.f32 %v212, %v213
        %275 = vmax.xlane.f32.xlu0 %v274
        %v276 = vpop.xlane.xlu0 %275
        %v277 = vmax.f32 %v214, %v215
        %278 = vmax.xlane.f32.xlu0 %v277
        %v279 = vpop.xlane.xlu0 %278
        %v280 = vmax.f32 %v216, %v217
        %281 = vmax.xlane.f32.xlu0 %v280
        %v282 = vpop.xlane.xlu0 %281
        %v283 = vmax.f32 %v218, %v219
        %284 = vmax.xlane.f32.xlu0 %v283
        %v285 = vpop.xlane.xlu0 %284
        %v286 = vmax.f32 %v220, %v221
        %287 = vmax.xlane.f32.xlu0 %v286
        %v288 = vpop.xlane.xlu0 %287
        %v289 = vmax.f32 %v222, %v223
        %290 = vmax.xlane.f32.xlu0 %v289
        %v291 = vpop.xlane.xlu0 %290
        %v292 = vmax.f32 %v224, %v225
        %293 = vmax.xlane.f32.xlu0 %v292
        %v294 = vpop.xlane.xlu0 %293
        %v295 = vsub.f32 %v210, %v273
        %v296 = vsub.f32 %v211, %v273
        %v297 = vsub.f32 %v212, %v276
        %v298 = vsub.f32 %v213, %v276
        %v299 = vsub.f32 %v214, %v279
        %v300 = vsub.f32 %v215, %v279
        %v301 = vsub.f32 %v216, %v282
        %v302 = vsub.f32 %v217, %v282
        %v303 = vsub.f32 %v218, %v285
        %v304 = vsub.f32 %v219, %v285
        %v305 = vsub.f32 %v220, %v288
        %v306 = vsub.f32 %v221, %v288
        %v307 = vsub.f32 %v222, %v291
        %v308 = vsub.f32 %v223, %v291
        %v309 = vsub.f32 %v224, %v294
        %v310 = vsub.f32 %v225, %v294
        %v311 = vmul.f32 %v295, 1.442695
        %v312 = vpow.pop %v311
        %v313 = vmul.f32 %v296, 1.442695
        %v314 = vpow.pop %v313
        %v315 = vmul.f32 %v297, 1.442695
        %v316 = vpow.pop %v315
        %v317 = vmul.f32 %v298, 1.442695
        %v318 = vpow.pop %v317
        %v319 = vmul.f32 %v299, 1.442695
        %v320 = vpow.pop %v319
        %v321 = vmul.f32 %v300, 1.442695
        %v322 = vpow.pop %v321
        %v323 = vmul.f32 %v301, 1.442695
        %v324 = vpow.pop %v323
        %v325 = vmul.f32 %v302, 1.442695
        %v326 = vpow.pop %v325
        %v327 = vmul.f32 %v303, 1.442695
        %v328 = vpow.pop %v327
        %v329 = vmul.f32 %v304, 1.442695
        %v330 = vpow.pop %v329
        %v331 = vmul.f32 %v305, 1.442695
        %v332 = vpow.pop %v331
        %v333 = vmul.f32 %v306, 1.442695
        %v334 = vpow.pop %v333
        %v335 = vmul.f32 %v307, 1.442695
        %v336 = vpow.pop %v335
        %v337 = vmul.f32 %v308, 1.442695
        %v338 = vpow.pop %v337
        %v339 = vmul.f32 %v309, 1.442695
        %v340 = vpow.pop %v339
        %v341 = vmul.f32 %v310, 1.442695
        %v342 = vpow.pop %v341
        %v343 = vadd.f32 %v312, %v314
        %344 = vadd.xlane.f32.xlu0 %v343
        %v345 = vpop.xlane.xlu0 %344
        %v346 = vadd.f32 %v316, %v318
        %347 = vadd.xlane.f32.xlu0 %v346
        %v348 = vpop.xlane.xlu0 %347
        %v349 = vadd.f32 %v320, %v322
        %350 = vadd.xlane.f32.xlu0 %v349
        %v351 = vpop.xlane.xlu0 %350
        %v352 = vadd.f32 %v324, %v326
        %353 = vadd.xlane.f32.xlu0 %v352
        %v354 = vpop.xlane.xlu0 %353
        %v355 = vadd.f32 %v328, %v330
        %356 = vadd.xlane.f32.xlu0 %v355
        %v357 = vpop.xlane.xlu0 %356
        %v358 = vadd.f32 %v332, %v334
        %359 = vadd.xlane.f32.xlu0 %v358
        %v360 = vpop.xlane.xlu0 %359
        %v361 = vadd.f32 %v336, %v338
        %362 = vadd.xlane.f32.xlu0 %v361
        %v363 = vpop.xlane.xlu0 %362
        %v364 = vadd.f32 %v340, %v342
        %365 = vadd.xlane.f32.xlu0 %v364
        %v366 = vpop.xlane.xlu0 %365
        %v367 = vld [vmem:[#allocation4] sm:$0x1]
        %v368 = vlog2.pop %v345
        %v369 = vmul.f32 %v368, 0.6931472
        %v370 = vlog2.pop %v348
        %v371 = vmul.f32 %v370, 0.6931472
        %v372 = vlog2.pop %v351
        %v373 = vmul.f32 %v372, 0.6931472
        %v374 = vlog2.pop %v354
        %v375 = vmul.f32 %v374, 0.6931472
        %v376 = vlog2.pop %v357
        %v377 = vmul.f32 %v376, 0.6931472
        %v378 = vlog2.pop %v360
        %v379 = vmul.f32 %v378, 0.6931472
        %v380 = vlog2.pop %v363
        %v381 = vmul.f32 %v380, 0.6931472
        %v382 = vlog2.pop %v366
        %v383 = vmul.f32 %v382, 0.6931472
        %v384 = vadd.f32 %v369, %v273
        %v385 = vadd.f32 %v371, %v276
        %v386 = vadd.f32 %v373, %v279
        %v387 = vadd.f32 %v375, %v282
        %v388 = vadd.f32 %v377, %v285
        %v389 = vadd.f32 %v379, %v288
        %v390 = vadd.f32 %v381, %v291
        %v391 = vadd.f32 %v383, %v294
        %vm392 = vcmask 7168
        %v393 = vsel %vm392, %v384, 0.0
        %v394 = vsel %vm392, %v385, 0.0
        %v395 = vadd.f32 %v393, %v394
        %v396 = vsel %vm392, %v386, 0.0
        %v397 = vadd.f32 %v395, %v396
        %v398 = vsel %vm392, %v387, 0.0
        %v399 = vadd.f32 %v397, %v398
        %v400 = vsel %vm392, %v388, 0.0
        %v401 = vadd.f32 %v399, %v400
        %v402 = vsel %vm392, %v389, 0.0
        %v403 = vadd.f32 %v401, %v402
        %v404 = vsel %vm392, %v390, 0.0
        %v405 = vadd.f32 %v403, %v404
        %v406 = vsel %vm392, %v391, 0.0
        %v407 = vadd.f32 %v405, %v406
        %408 = vadd.xlane.f32.xlu0 %v407
        %v409 = vpop.xlane.xlu0 %408
        %v410 = vrot.slane %v409, 4
        %v411 = vadd.f32 %v409, %v410
        %v412 = vrot.slane %v411, 2
        %v413 = vadd.f32 %v411, %v412
        %v414 = vrot.slane %v413, 1
        %v415 = vadd.f32 %v413, %v414
        %s416 = vtos %v415
        %v417 = vstv %s416
        %v418 = vadd.f32 %v367, %v417
        %419 = vst.msk [vmem:[#allocation4] sm:$0x1] %vm269, %v418
        %v420 = vmax.f32 %v210, %v214
        %v421 = vmax.f32 %v212, %v216
        %v422 = vmax.f32 %v420, %v218
        %v423 = vmax.f32 %v421, %v220
        %v424 = vmax.f32 %v422, %v222
        %v425 = vmax.f32 %v423, %v224
        %v426 = vmax.f32 %v424, %v425
        %v427 = vrot.slane %v426, 4
        %v428 = vmax.f32 %v426, %v427
        %v429 = vrot.slane %v428, 2
        %v430 = vmax.f32 %v428, %v429
        %v431 = vrot.slane %v430, 1
        %v432 = vmax.f32 %v430, %v431
        %v433 = vmax.f32 %v211, %v215
        %v434 = vmax.f32 %v213, %v217
        %v435 = vmax.f32 %v433, %v219
        %v436 = vmax.f32 %v434, %v221
        %v437 = vmax.f32 %v435, %v223
        %v438 = vmax.f32 %v436, %v225
        %v439 = vmax.f32 %v437, %v438
        %v440 = vrot.slane %v439, 4
        %v441 = vmax.f32 %v439, %v440
        %v442 = vrot.slane %v441, 2
        %v443 = vmax.f32 %v441, %v442
        %v444 = vrot.slane %v443, 1
        %v445 = vmax.f32 %v443, %v444
        %v446 = vld [vmem:[#allocation2] sm:$0x3]
        %v449 = vrot.slane %v445, 7
        %vm450 = vcmask 1040384
        %v451 = vsel %vm450, %v432, %v449
        %v453 = vmax.f32 %v446, %v451
        %v454 = vmax.f32 %v273, %v285
        %v455 = vmax.f32 %v276, %v288
        %v456 = vmax.f32 %v279, %v291
        %v457 = vmax.f32 %v282, %v294
        %v458 = vmax.f32 %v454, %v455
        %v459 = vmax.f32 %v456, %v457
        %v460 = vmax.f32 %v458, %v459
        %v461 = vrot.slane %v460, 4
        %v462 = vmax.f32 %v460, %v461
        %v463 = vrot.slane %v462, 2
        %v464 = vmax.f32 %v462, %v463
        %v465 = vrot.slane %v464, 1
        %v466 = vmax.f32 %v464, %v465
        %v467 = vsub.f32 %v273, %v466
        %v468 = vsub.f32 %v276, %v466
        %v469 = vsub.f32 %v279, %v466
        %v470 = vsub.f32 %v282, %v466
        %v471 = vsub.f32 %v285, %v466
        %v472 = vsub.f32 %v288, %v466
        %v473 = vsub.f32 %v291, %v466
        %v474 = vsub.f32 %v294, %v466
        %v475 = vmul.f32 %v467, 1.442695
        %v476 = vpow.pop %v475
        %v477 = vmul.f32 %v468, 1.442695
        %v478 = vpow.pop %v477
        %v479 = vmul.f32 %v469, 1.442695
        %v480 = vpow.pop %v479
        %v481 = vmul.f32 %v470, 1.442695
        %v482 = vpow.pop %v481
        %v483 = vmul.f32 %v471, 1.442695
        %v484 = vpow.pop %v483
        %v485 = vmul.f32 %v472, 1.442695
        %v486 = vpow.pop %v485
        %v487 = vmul.f32 %v473, 1.442695
        %v488 = vpow.pop %v487
        %v489 = vmul.f32 %v474, 1.442695
        %v490 = vpow.pop %v489
        %v491 = vmul.f32 %v312, %v476
        %v492 = vmul.f32 %v314, %v476
        %v493 = vmul.f32 %v316, %v478
        %v494 = vmul.f32 %v318, %v478
        %v495 = vmul.f32 %v320, %v480
        %v496 = vmul.f32 %v322, %v480
        %v497 = vmul.f32 %v324, %v482
        %v498 = vmul.f32 %v326, %v482
        %v499 = vmul.f32 %v328, %v484
        %v500 = vmul.f32 %v330, %v484
        %v501 = vmul.f32 %v332, %v486
        %v502 = vmul.f32 %v334, %v486
        %v503 = vmul.f32 %v336, %v488
        %v504 = vmul.f32 %v338, %v488
        %v505 = vmul.f32 %v340, %v490
        %v506 = vmul.f32 %v342, %v490
        %v507 = vadd.f32 %v491, %v493
        %v508 = vadd.f32 %v507, %v495
        %v509 = vadd.f32 %v508, %v497
        %v510 = vadd.f32 %v509, %v499
        %v511 = vadd.f32 %v510, %v501
        %v512 = vadd.f32 %v511, %v503
        %v513 = vadd.f32 %v512, %v505
        %v514 = vrot.slane %v513, 4
        %v515 = vadd.f32 %v513, %v514
        %v516 = vrot.slane %v515, 2
        %v517 = vadd.f32 %v515, %v516
        %v518 = vrot.slane %v517, 1
        %v519 = vadd.f32 %v517, %v518
        %v520 = vadd.f32 %v492, %v494
        %v521 = vadd.f32 %v520, %v496
        %v522 = vadd.f32 %v521, %v498
        %v523 = vadd.f32 %v522, %v500
        %v524 = vadd.f32 %v523, %v502
        %v525 = vadd.f32 %v524, %v504
        %v526 = vadd.f32 %v525, %v506
        %v527 = vrot.slane %v526, 4
        %v528 = vadd.f32 %v526, %v527
        %v529 = vrot.slane %v528, 2
        %v530 = vadd.f32 %v528, %v529
        %v531 = vrot.slane %v530, 1
        %v532 = vadd.f32 %v530, %v531
        %v533 = vsub.f32 %v466, %v453
        %v534 = vmin.f32 %v533, 80.0
        %v535 = vmul.f32 %v534, 1.442695
        %v536 = vpow.pop %v535
        %v537 = vld [vmem:[#allocation3] sm:$0x3]
        %v538 = vsub.f32 %v446, %v453
        %v539 = vmul.f32 %v538, 1.442695
        %v540 = vpow.pop %v539
        %v541 = vmul.f32 %v537, %v540
        %v543 = vperm.slane %v536, 0
        %v544 = vperm.slane %v536, 1
        %v547 = vmul.f32 %v519, %v543
        %v548 = vmul.f32 %v532, %v544
        %v551 = vrot.slane %v548, 7
        %v552 = vsel %vm450, %v547, %v551
        %v554 = vadd.f32 %v541, %v552
        %v555 = vlaneseq
        %vm556 = vcmp.ge.s32.totalorder %v555, 0
        %vm557 = vcmp.lt.s32.totalorder %v555, 256
        %vm558 = vmand %vm556, %vm557
        %559 = vst.msk [vmem:[#allocation3] sm:$0x3] %vm558, %v554
        %560 = vst.msk [vmem:[#allocation2] sm:$0x3] %vm558, %v453
        %p561 = scmp.eq.s32.totalorder %s16, 3
        // Predicated region
        $region33: #{tpu_custom_call.1} parent=23 // pred_check
          %p562 = pneg %p561
        $region34: #{tpu_custom_call.1} parent=23 // pred_check_branch
          %564 = sbr.rel (%p562) target = $region36
        $region35: #{tpu_custom_call.1} parent=23 // pred_region
          %v565 = vld [vmem:[#allocation3] sm:$0x3]
          %v566 = vlog2.pop %v565
          %v567 = vmul.f32 %v566, 0.6931472
          %v568 = vld [vmem:[#allocation2] sm:$0x3]
          %v569 = vadd.f32 %v567, %v568
          %v571 = vperm.slane %v569, 0
          %v572 = vperm.slane %v569, 1
          %v575 = vsel %vm450, %v571, 0.0
          %v576 = vsel %vm450, %v572, 0.0
          %v577 = vadd.f32 %v575, %v576
          %578 = vadd.xlane.f32.xlu0 %v577
          %v579 = vpop.xlane.xlu0 %578
          %v580 = vrot.slane %v579, 4
          %v581 = vadd.f32 %v579, %v580
          %v582 = vrot.slane %v581, 2
          %v583 = vadd.f32 %v581, %v582
          %v584 = vrot.slane %v583, 1
          %v585 = vadd.f32 %v583, %v584
          %s586 = vtos %v585
          %v587 = vld [vmem:[#allocation4] sm:$0x1]
          %v588 = vld [vmem:[#allocation5] sm:$0x1]
          %v589 = vsub.f32 %v587, %v588
          %v590 = vmul.f32 %v589, 0.00390625
          %v591 = vstv %s586
          %v592 = vsub.f32 %v591, %v588
          %v593 = vmul.f32 %v592, 0.00390625
          %v594 = vadd.f32 %v590, %v593
          %595 = vst.msk [vmem:[#allocation9] sm:$0x1] %vm269, %v594
        $region36: #{tpu_custom_call.1} parent=23 // pred_fallthru
          _
        // Predicated region
        $region37: #{tpu_custom_call.1} parent=23 // pred_check
          %p596 = pneg %p55
        $region38: #{tpu_custom_call.1} parent=23 // pred_check_branch
          %598 = sbr.rel (%p596) target = $region40
        $region39: #{tpu_custom_call.1} parent=23 // pred_region
          %600 = vsyncadd [#allocation8], 0
          %s602 = sshll.u32 [#allocation9], 4
          %s603 = int_to_ptr.vmem [resolvable:$true] %s602
          %s604 = sshll.u32 %s1, 4
          %s605 = int_to_ptr.hbm [resolvable:$true] %s604
          %607 = dma.vmem_to_hbm [thread:$0]  %s603, 16, %s605, [#allocation8]
        $region40: #{tpu_custom_call.1} parent=23 // pred_fallthru
          _
        // Predicated region
        $region41: #{tpu_custom_call.1} parent=23 // pred_check
          %p608 = pneg %p55
        $region42: #{tpu_custom_call.1} parent=23 // pred_check_branch
          %610 = sbr.rel (%p608) target = $region44
        $region43: #{tpu_custom_call.1} parent=23 // pred_region
          %612 = dma.done [#allocation8], 16
        $region44: #{tpu_custom_call.1} parent=23 // pred_fallthru
          _
      $region24: #{tpu_custom_call.1} parent=5 // pred_fallthru
        _
      %p613 = scmp.le.s32.totalorder 2, %s11
      // Predicated region
      $region45: #{tpu_custom_call.1} parent=5 // pred_check
        %p614 = pneg %p613
      $region46: #{tpu_custom_call.1} parent=5 // pred_check_branch
        %616 = sbr.rel (%p614) target = $region48
      $region47: #{tpu_custom_call.1} parent=5 // pred_region
        %s617 = ssub.s32 %s11, 2
      $region48: #{tpu_custom_call.1} parent=5 // pred_fallthru
        _
    $region6: #{tpu_custom_call.1} parent=1 // loop_footer
      %s15 = sadd.s32 1, %s11
    $region7: #{tpu_custom_call.1} parent=1 // loop_footer_branch
      %10 = sbr.rel target = $region3
    $region8: #{tpu_custom_call.1} parent=1 // loop_exit
      _
    %618 = vsyncpa [#allocation7], 1
    %s619 = scalar_lea.sflag [#allocation7], 1
    %620 = vsyncpa %s619, 1
    %621 = vsyncpa [#allocation8], 1
    %s622 = scalar_lea.sflag [#allocation8], 1
    %623 = vsyncpa %s622, 1

</llo_original>
